<compile_context>
chip_gen: v7x
topology: tpu7x:2x2x1
jax: 0.10.0
libtpu: 0.0.40
codegen_flags: <defaults>
</compile_context>

<pallas_src>
import functools
import math

import jax
import jax.numpy as jnp
from jax.experimental import pallas as pl
from jax.experimental.pallas import tpu as pltpu

HIDDEN = 256          # feature / attention width
HEAD_HIDDEN = 128     # value / advantage hidden width
KEY_DIM = 64          # attention key width
KEY_PAD = 128         # key lanes padded to a full vreg width
KV_WIDTH = HIDDEN + KEY_PAD   # 384: fused [values | keys(padded)] projection
OUT_MIN_PAD = 128     # minimum lane-dense output width


def _round_up(n, m):
    return ((n + m - 1) // m) * m


def dueling_dqn_kernel(
    scalars_ref,                 # SMEM f32[1]: [attention score bias ba]
    x_ref,                       # [TB, D_in] f32 (cast to bf16 in-kernel)
    w1_ref, b1_ref,              # [D_in, 256] bf16, [1, 256] f32
    w2_ref, b2_ref,              # [256, 256] bf16, [1, 256] f32
    wkv_ref, bkv_ref,            # [256, 384] bf16, [1, 384] f32  (fused values | keys)
    wa_row_ref,                  # [1, 128] f32                   (attention score weights, padded)
    wh_ref, bh_ref,              # [256, 256] bf16, [1, 256] f32  (fused value|advantage hidden)
    wva_ref, bva_ref,            # [256, out_pad] bf16, [1, out_pad] f32 (fused adv head + value lane)
    out_ref,                     # [TB, out_pad] bf16 (cols 0:A hold the Q-values)
    *, num_actions,
):
    f32 = jnp.float32
    bf16 = jnp.bfloat16

    x = x_ref[...].astype(bf16)                                          # cast on-chip, no HBM pass

    # ---- feature layer: Linear -> ReLU -> Linear -> ReLU (f32 accum / elementwise) ----
    h = jnp.dot(x, w1_ref[...], preferred_element_type=f32) + b1_ref[...]
    h = jnp.maximum(h, 0.0)
    h = jnp.dot(h.astype(bf16), w2_ref[...], preferred_element_type=f32) + b2_ref[...]
    h = jnp.maximum(h, 0.0)                                              # [TB, 256] f32

    # ---- attention module: one fused projection produces [values | keys(pad)] ----
    kv = jnp.dot(h.astype(bf16), wkv_ref[...], preferred_element_type=f32) + bkv_ref[...]
    values = kv[:, :HIDDEN]                                              # [TB, 256]
    keys = jnp.tanh(kv[:, HIDDEN:])                                      # [TB, 128]; padded lanes = 0
    # N=1 score matmul -> VPU multiply + XLU lane reduction instead of an MXU pass
    scores = jnp.sum(keys * wa_row_ref[...], axis=-1, keepdims=True) + scalars_ref[0]
    attn = jax.nn.sigmoid(scores)                                        # [TB, 1]
    feat = h + values * attn                                             # [TB, 256] f32

    # ---- fused value/advantage first layer: single 256x256 matmul + ReLU ----
    hidden = jnp.dot(feat.astype(bf16), wh_ref[...], preferred_element_type=f32) + bh_ref[...]
    hidden = jnp.maximum(hidden, 0.0)                                    # [TB, 256] (v_hidden | a_hidden)

    # ---- fused output head: one full-K [256, out_pad] matmul.
    # cols [0, A)        : advantages      (driven only by the a_hidden rows of wva)
    # cols [A, out_pad-1): exactly zero    (zero weights + zero bias)
    # col  out_pad-1     : state value     (driven only by the v_hidden rows of wva)
    comb = jnp.dot(hidden.astype(bf16), wva_ref[...], preferred_element_type=f32) + bva_ref[...]
    out_pad = comb.shape[-1]
    v = comb[:, out_pad - 1:out_pad]                                     # [TB, 1] value head
    adv_sum = jnp.sum(comb, axis=-1, keepdims=True) - v                  # padded cols are exactly 0
    a_mean = adv_sum * (1.0 / num_actions)

    # dueling combine; lane-dense bf16 store (cols >= A hold junk and are sliced off by the caller)
    out_ref[...] = (comb + (v - a_mean)).astype(out_ref.dtype)


def prepare_params(p):
    """Fuse / pad / cast the raw per-layer params into the kernel layout (done once).

    NOTE: the dueling mean relies on the padded columns of wva/bva being exactly zero
    and the value head occupying the last lane; any in-place parameter update after
    fusion must preserve this packing.
    """
    bf16, f32 = jnp.bfloat16, jnp.float32
    num_actions = p["wa2"].shape[1]
    out_pad = max(OUT_MIN_PAD, _round_up(num_actions + 1, 128))  # +1 lane reserved for the value head

    wkv = jnp.zeros((HIDDEN, KV_WIDTH), f32)
    wkv = wkv.at[:, :HIDDEN].set(p["wv"]).at[:, HIDDEN:HIDDEN + KEY_DIM].set(p["wk"])
    bkv = jnp.zeros((1, KV_WIDTH), f32)
    bkv = bkv.at[:, :HIDDEN].set(p["bv"]).at[:, HIDDEN:HIDDEN + KEY_DIM].set(p["bk"])
    wa_row = jnp.zeros((1, KEY_PAD), f32).at[:, :KEY_DIM].set(p["wa"].T)

    # Fused value/advantage output head on `hidden = [v_hidden | a_hidden]`:
    #   rows 0:128   (v_hidden) -> only the last column = wv2      (value head)
    #   rows 128:256 (a_hidden) -> cols 0:num_actions   = wa2      (advantage head)
    wva = jnp.zeros((HIDDEN, out_pad), f32)
    wva = wva.at[HEAD_HIDDEN:, :num_actions].set(p["wa2"])
    wva = wva.at[:HEAD_HIDDEN, out_pad - 1].set(p["wv2"][:, 0])
    bva = jnp.zeros((1, out_pad), f32)
    bva = bva.at[:, :num_actions].set(p["ba2"])
    bva = bva.at[:, out_pad - 1].set(p["bv2"][0, 0])

    return dict(
        scalars=jnp.array([p["ba"][0, 0]], f32),                         # attention score bias (SMEM)
        w1=p["w1"].astype(bf16), b1=p["b1"].astype(f32),
        w2=p["w2"].astype(bf16), b2=p["b2"].astype(f32),
        wkv=wkv.astype(bf16), bkv=bkv,
        wa_row=wa_row,
        wh=jnp.concatenate([p["wv1"], p["wa1"]], axis=1).astype(bf16),   # [256, 256]
        bh=jnp.concatenate([p["bv1"], p["ba1"]], axis=1).astype(f32),    # [1, 256]
        wva=wva.astype(bf16), bva=bva,
        num_actions=num_actions,
    )


def _pick_batch_tile(B):
    if B <= 256:
        return B                      # one block == full batch dim (always a legal block shape)
    # >= 2 tiles so the "parallel" batch axis shards across both v7x TensorCores;
    # cap at 2048 rows so f32 intermediates stay well within the 32 MiB scoped-VMEM budget.
    # (On v5e/v6e with 128 MiB VMEM one can raise vmem_limit_bytes and try 4096.)
    half = (B + 1) // 2
    return min(2048, _round_up(half, 256))


def dueling_dqn_forward(x, fused, *, slice_output=True):
    """x: [B, input_dim] float32 (no wrapper-side pad/cast); fused: output of prepare_params.

    Returns bf16 Q-values [B, num_actions] (or the full lane-padded [B, out_pad] buffer when
    slice_output=False, which avoids an extra XLA pass over the output for consumers such as
    argmax that can operate on the first num_actions lanes directly).
    """
    B, d_in = x.shape
    num_actions = fused["num_actions"]
    out_pad = fused["wva"].shape[1]

    TB = _pick_batch_tile(B)
    grid = (pl.cdiv(B, TB),)

    def full(arr):  # resident weight: full-array block, constant index_map (fetched once)
        nd = arr.ndim
        return pl.BlockSpec(arr.shape, lambda i, nd=nd: (0,) * nd)

    order = ("w1", "b1", "w2", "b2", "wkv", "bkv", "wa_row", "wh", "bh", "wva", "bva")
    weights = [fused[k] for k in order]

    in_specs = (
        [pl.BlockSpec(memory_space=pltpu.MemorySpace.SMEM),   # scalar attention bias in SMEM
         pl.BlockSpec((TB, d_in), lambda i: (i, 0))]          # batch-tiled activations (f32)
        + [full(w) for w in weights]
    )
    out_spec = pl.BlockSpec((TB, out_pad), lambda i: (i, 0))  # lane-dense bf16 output block

    q_pad = pl.pallas_call(
        functools.partial(dueling_dqn_kernel, num_actions=num_actions),
        out_shape=jax.ShapeDtypeStruct((B, out_pad), jnp.bfloat16),
        grid=grid,
        in_specs=in_specs,
        out_specs=out_spec,
        compiler_params=pltpu.CompilerParams(
            dimension_semantics=("parallel",),        # batch tiles are independent
            vmem_limit_bytes=32 * 1024 * 1024,        # explicit budget (safe on v5e/v6e/v7x)
        ),
    )(fused["scalars"], x, *weights)

    if slice_output:
        return q_pad[:, :num_actions]
    return q_pad


def init_params(key, input_dim, output_dim):
    """Deterministic PyTorch-style (uniform +-1/sqrt(fan_in)) init, f32 master copy."""
    def linear(key, fan_in, fan_out):
        kw, kb = jax.random.split(key)
        bound = 1.0 / math.sqrt(fan_in)
        w = jax.random.uniform(kw, (fan_in, fan_out), jnp.float32, -bound, bound)
        b = jax.random.uniform(kb, (1, fan_out), jnp.float32, -bound, bound)
        return w, b

    keys = jax.random.split(key, 9)
    p = {}
    p["w1"], p["b1"] = linear(keys[0], input_dim, HIDDEN)
    p["w2"], p["b2"] = linear(keys[1], HIDDEN, HIDDEN)
    p["wk"], p["bk"] = linear(keys[2], HIDDEN, KEY_DIM)      # key_transform
    p["wv"], p["bv"] = linear(keys[3], HIDDEN, HIDDEN)       # value_transform
    p["wa"], p["ba"] = linear(keys[4], KEY_DIM, 1)           # attention_weights
    p["wv1"], p["bv1"] = linear(keys[5], HIDDEN, HEAD_HIDDEN)
    p["wv2"], p["bv2"] = linear(keys[6], HEAD_HIDDEN, 1)
    p["wa1"], p["ba1"] = linear(keys[7], HIDDEN, HEAD_HIDDEN)
    p["wa2"], p["ba2"] = linear(keys[8], HEAD_HIDDEN, output_dim)
    return p


def dueling_dqn_ref(x, p):
    """Pure-JAX f32 reference mirroring the PyTorch forward."""
    h = jnp.maximum(x @ p["w1"] + p["b1"], 0.0)
    h = jnp.maximum(h @ p["w2"] + p["b2"], 0.0)
    keys = jnp.tanh(h @ p["wk"] + p["bk"])
    values = h @ p["wv"] + p["bv"]
    attn = jax.nn.sigmoid(keys @ p["wa"] + p["ba"])
    feat = h + values * attn
    v = jnp.maximum(feat @ p["wv1"] + p["bv1"], 0.0) @ p["wv2"] + p["bv2"]
    a = jnp.maximum(feat @ p["wa1"] + p["ba1"], 0.0) @ p["wa2"] + p["ba2"]
    return v + (a - jnp.mean(a, axis=1, keepdims=True))


if __name__ == "__main__":
    B, INPUT_DIM, OUTPUT_DIM = 8, 32, 8

    key = jax.random.PRNGKey(0)
    kx, kp = jax.random.split(key)
    x = jax.random.normal(kx, (B, INPUT_DIM), jnp.float32)
    params = init_params(kp, INPUT_DIM, OUTPUT_DIM)
    fused = prepare_params(params)

    q = dueling_dqn_forward(x, fused)
    q = jax.block_until_ready(q)

    q_ref = dueling_dqn_ref(x, params)
    assert q.shape == (B, OUTPUT_DIM)
    # bf16 matmul operands + bf16 output (f32 accumulation) -> a few e-3 abs error vs f32 reference.
    err = float(jnp.max(jnp.abs(q.astype(jnp.float32) - q_ref)))
    assert err < 5e-2, err

    print("KERNEL_OK")
</pallas_src>

<mosaic_0001>
module attributes {stable_mosaic.version = 11 : i64} {
  func.func @dueling_dqn_kernel(%arg0: i32, %arg1: memref<1xf32, #tpu.memory_space<smem>>, %arg2: memref<8x32xf32, #tpu.memory_space<vmem>>, %arg3: memref<32x256xbf16, #tpu.memory_space<vmem>>, %arg4: memref<1x256xf32, #tpu.memory_space<vmem>>, %arg5: memref<256x256xbf16, #tpu.memory_space<vmem>>, %arg6: memref<1x256xf32, #tpu.memory_space<vmem>>, %arg7: memref<256x384xbf16, #tpu.memory_space<vmem>>, %arg8: memref<1x384xf32, #tpu.memory_space<vmem>>, %arg9: memref<1x128xf32, #tpu.memory_space<vmem>>, %arg10: memref<256x256xbf16, #tpu.memory_space<vmem>>, %arg11: memref<1x256xf32, #tpu.memory_space<vmem>>, %arg12: memref<256x128xbf16, #tpu.memory_space<vmem>>, %arg13: memref<1x128xf32, #tpu.memory_space<vmem>>, %arg14: memref<8x128xbf16, #tpu.memory_space<vmem>>) attributes {dimension_semantics = [#tpu.dimension_semantics<parallel>], iteration_bounds = array<i64: 1>, scalar_prefetch = 0 : i64, scratch_operands = 0 : i64, tpu.core_type = #tpu.core_type<tc>, window_params = [{transform_indices = @transform_0, window_bounds = array<i64: 1>}, {transform_indices = @transform_1, window_bounds = array<i64: 8, 32>}, {pipeline_mode = #tpu.pipeline_mode<synchronous>, transform_indices = @transform_2, window_bounds = array<i64: 32, 256>}, {pipeline_mode = #tpu.pipeline_mode<synchronous>, transform_indices = @transform_3, window_bounds = array<i64: 1, 256>}, {pipeline_mode = #tpu.pipeline_mode<synchronous>, transform_indices = @transform_4, window_bounds = array<i64: 256, 256>}, {pipeline_mode = #tpu.pipeline_mode<synchronous>, transform_indices = @transform_5, window_bounds = array<i64: 1, 256>}, {pipeline_mode = #tpu.pipeline_mode<synchronous>, transform_indices = @transform_6, window_bounds = array<i64: 256, 384>}, {pipeline_mode = #tpu.pipeline_mode<synchronous>, transform_indices = @transform_7, window_bounds = array<i64: 1, 384>}, {pipeline_mode = #tpu.pipeline_mode<synchronous>, transform_indices = @transform_8, window_bounds = array<i64: 1, 128>}, {pipeline_mode = #tpu.pipeline_mode<synchronous>, transform_indices = @transform_9, window_bounds = array<i64: 256, 256>}, {pipeline_mode = #tpu.pipeline_mode<synchronous>, transform_indices = @transform_10, window_bounds = array<i64: 1, 256>}, {pipeline_mode = #tpu.pipeline_mode<synchronous>, transform_indices = @transform_11, window_bounds = array<i64: 256, 128>}, {pipeline_mode = #tpu.pipeline_mode<synchronous>, transform_indices = @transform_12, window_bounds = array<i64: 1, 128>}, {transform_indices = @transform_13, window_bounds = array<i64: 8, 128>}]} {
    %c0 = arith.constant 0 : index
    %c0_0 = arith.constant 0 : index
    %0 = vector.load %arg2[%c0, %c0_0] : memref<8x32xf32, #tpu.memory_space<vmem>>, vector<8x32xf32>
    %1 = arith.truncf %0 : vector<8x32xf32> to vector<8x32xbf16>
    %c0_1 = arith.constant 0 : index
    %c0_2 = arith.constant 0 : index
    %2 = vector.load %arg3[%c0_1, %c0_2] : memref<32x256xbf16, #tpu.memory_space<vmem>>, vector<32x256xbf16>
    %cst = arith.constant dense<0.000000e+00> : vector<8x256xf32>
    %3 = tpu.matmul %1, %2, %cst {dimension_numbers = #tpu.dot_dimension_numbers<[1], [0], [0], [1], [0, 0, 1, 1], [], []>} : vector<8x32xbf16>, vector<32x256xbf16>, vector<8x256xf32> -> vector<8x256xf32>
    %c0_3 = arith.constant 0 : index
    %c0_4 = arith.constant 0 : index
    %4 = vector.load %arg4[%c0_3, %c0_4] : memref<1x256xf32, #tpu.memory_space<vmem>>, vector<1x256xf32>
    %5 = vector.broadcast %4 : vector<1x256xf32> to vector<8x256xf32>
    %6 = arith.addf %3, %5 : vector<8x256xf32>
    %cst_5 = arith.constant 0.000000e+00 : f32
    %7 = vector.broadcast %cst_5 : f32 to vector<8x256xf32>
    %8 = arith.maximumf %6, %7 : vector<8x256xf32>
    %9 = arith.truncf %8 : vector<8x256xf32> to vector<8x256xbf16>
    %c0_6 = arith.constant 0 : index
    %c0_7 = arith.constant 0 : index
    %10 = vector.load %arg5[%c0_6, %c0_7] : memref<256x256xbf16, #tpu.memory_space<vmem>>, vector<256x256xbf16>
    %cst_8 = arith.constant dense<0.000000e+00> : vector<8x256xf32>
    %11 = tpu.matmul %9, %10, %cst_8 {dimension_numbers = #tpu.dot_dimension_numbers<[1], [0], [0], [1], [0, 0, 1, 1], [], []>} : vector<8x256xbf16>, vector<256x256xbf16>, vector<8x256xf32> -> vector<8x256xf32>
    %c0_9 = arith.constant 0 : index
    %c0_10 = arith.constant 0 : index
    %12 = vector.load %arg6[%c0_9, %c0_10] : memref<1x256xf32, #tpu.memory_space<vmem>>, vector<1x256xf32>
    %13 = vector.broadcast %12 : vector<1x256xf32> to vector<8x256xf32>
    %14 = arith.addf %11, %13 : vector<8x256xf32>
    %cst_11 = arith.constant 0.000000e+00 : f32
    %15 = vector.broadcast %cst_11 : f32 to vector<8x256xf32>
    %16 = arith.maximumf %14, %15 : vector<8x256xf32>
    %17 = arith.truncf %16 : vector<8x256xf32> to vector<8x256xbf16>
    %c0_12 = arith.constant 0 : index
    %c0_13 = arith.constant 0 : index
    %18 = vector.load %arg7[%c0_12, %c0_13] : memref<256x384xbf16, #tpu.memory_space<vmem>>, vector<256x384xbf16>
    %cst_14 = arith.constant dense<0.000000e+00> : vector<8x384xf32>
    %19 = tpu.matmul %17, %18, %cst_14 {dimension_numbers = #tpu.dot_dimension_numbers<[1], [0], [0], [1], [0, 0, 1, 1], [], []>} : vector<8x256xbf16>, vector<256x384xbf16>, vector<8x384xf32> -> vector<8x384xf32>
    %c0_15 = arith.constant 0 : index
    %c0_16 = arith.constant 0 : index
    %20 = vector.load %arg8[%c0_15, %c0_16] : memref<1x384xf32, #tpu.memory_space<vmem>>, vector<1x384xf32>
    %21 = vector.broadcast %20 : vector<1x384xf32> to vector<8x384xf32>
    %22 = arith.addf %19, %21 : vector<8x384xf32>
    %23 = vector.extract_strided_slice %22 {offsets = [0, 0], sizes = [8, 256], strides = [1, 1]} : vector<8x384xf32> to vector<8x256xf32>
    %24 = vector.extract_strided_slice %22 {offsets = [0, 256], sizes = [8, 128], strides = [1, 1]} : vector<8x384xf32> to vector<8x128xf32>
    %25 = math.tanh %24 : vector<8x128xf32>
    %c0_17 = arith.constant 0 : index
    %c0_18 = arith.constant 0 : index
    %26 = vector.load %arg9[%c0_17, %c0_18] : memref<1x128xf32, #tpu.memory_space<vmem>>, vector<1x128xf32>
    %27 = vector.broadcast %26 : vector<1x128xf32> to vector<8x128xf32>
    %28 = arith.mulf %25, %27 : vector<8x128xf32>
    %cst_19 = arith.constant dense<0.000000e+00> : vector<8xf32>
    %29 = vector.multi_reduction <add>, %28, %cst_19 [1] : vector<8x128xf32> to vector<8xf32>
    %30 = vector.shape_cast %29 : vector<8xf32> to vector<8x1xf32>
    %c0_20 = arith.constant 0 : index
    %31 = memref.load %arg1[%c0_20] : memref<1xf32, #tpu.memory_space<smem>>
    %32 = vector.broadcast %31 : f32 to vector<8x1xf32>
    %33 = arith.addf %30, %32 : vector<8x1xf32>
    %34 = arith.negf %33 : vector<8x1xf32>
    %35 = math.exp %34 : vector<8x1xf32>
    %cst_21 = arith.constant 1.000000e+00 : f32
    %36 = vector.broadcast %cst_21 : f32 to vector<8x1xf32>
    %37 = arith.addf %36, %35 : vector<8x1xf32>
    %38 = arith.divf %36, %37 : vector<8x1xf32>
    %39 = vector.broadcast %38 : vector<8x1xf32> to vector<8x256xf32>
    %40 = arith.mulf %23, %39 : vector<8x256xf32>
    %41 = arith.addf %16, %40 : vector<8x256xf32>
    %42 = arith.truncf %41 : vector<8x256xf32> to vector<8x256xbf16>
    %c0_22 = arith.constant 0 : index
    %c0_23 = arith.constant 0 : index
    %43 = vector.load %arg10[%c0_22, %c0_23] : memref<256x256xbf16, #tpu.memory_space<vmem>>, vector<256x256xbf16>
    %cst_24 = arith.constant dense<0.000000e+00> : vector<8x256xf32>
    %44 = tpu.matmul %42, %43, %cst_24 {dimension_numbers = #tpu.dot_dimension_numbers<[1], [0], [0], [1], [0, 0, 1, 1], [], []>} : vector<8x256xbf16>, vector<256x256xbf16>, vector<8x256xf32> -> vector<8x256xf32>
    %c0_25 = arith.constant 0 : index
    %c0_26 = arith.constant 0 : index
    %45 = vector.load %arg11[%c0_25, %c0_26] : memref<1x256xf32, #tpu.memory_space<vmem>>, vector<1x256xf32>
    %46 = vector.broadcast %45 : vector<1x256xf32> to vector<8x256xf32>
    %47 = arith.addf %44, %46 : vector<8x256xf32>
    %cst_27 = arith.constant 0.000000e+00 : f32
    %48 = vector.broadcast %cst_27 : f32 to vector<8x256xf32>
    %49 = arith.maximumf %47, %48 : vector<8x256xf32>
    %50 = arith.truncf %49 : vector<8x256xf32> to vector<8x256xbf16>
    %c0_28 = arith.constant 0 : index
    %c0_29 = arith.constant 0 : index
    %51 = vector.load %arg12[%c0_28, %c0_29] : memref<256x128xbf16, #tpu.memory_space<vmem>>, vector<256x128xbf16>
    %cst_30 = arith.constant dense<0.000000e+00> : vector<8x128xf32>
    %52 = tpu.matmul %50, %51, %cst_30 {dimension_numbers = #tpu.dot_dimension_numbers<[1], [0], [0], [1], [0, 0, 1, 1], [], []>} : vector<8x256xbf16>, vector<256x128xbf16>, vector<8x128xf32> -> vector<8x128xf32>
    %c0_31 = arith.constant 0 : index
    %c0_32 = arith.constant 0 : index
    %53 = vector.load %arg13[%c0_31, %c0_32] : memref<1x128xf32, #tpu.memory_space<vmem>>, vector<1x128xf32>
    %54 = vector.broadcast %53 : vector<1x128xf32> to vector<8x128xf32>
    %55 = arith.addf %52, %54 : vector<8x128xf32>
    %56 = vector.extract_strided_slice %55 {offsets = [0, 127], sizes = [8, 1], strides = [1, 1]} : vector<8x128xf32> to vector<8x1xf32>
    %cst_33 = arith.constant dense<0.000000e+00> : vector<8xf32>
    %57 = vector.multi_reduction <add>, %55, %cst_33 [1] : vector<8x128xf32> to vector<8xf32>
    %58 = vector.shape_cast %57 : vector<8xf32> to vector<8x1xf32>
    %59 = arith.subf %58, %56 : vector<8x1xf32>
    %cst_34 = arith.constant 1.250000e-01 : f32
    %60 = vector.broadcast %cst_34 : f32 to vector<8x1xf32>
    %61 = arith.mulf %59, %60 : vector<8x1xf32>
    %62 = arith.subf %56, %61 : vector<8x1xf32>
    %63 = vector.broadcast %62 : vector<8x1xf32> to vector<8x128xf32>
    %64 = arith.addf %55, %63 : vector<8x128xf32>
    %65 = arith.truncf %64 : vector<8x128xf32> to vector<8x128xbf16>
    %c0_35 = arith.constant 0 : index
    %c0_36 = arith.constant 0 : index
    %66 = vector.load %arg14[%c0_35, %c0_36] : memref<8x128xbf16, #tpu.memory_space<vmem>>, vector<8x128xbf16>
    tpu.vector_store %arg14[%c0_35, %c0_36], %65 {strides = array<i32>} : memref<8x128xbf16, #tpu.memory_space<vmem>>, vector<8x128xbf16>,
    return
  }
  func.func @transform_0(%arg0: i32) -> i32 {
    %c0_i32 = arith.constant 0 : i32
    %c0_i32_0 = arith.constant 0 : i32
    return %c0_i32 : i32
  }
  func.func @transform_1(%arg0: i32) -> (i32, i32) {
    %c0_i32 = arith.constant 0 : i32
    %c0_i32_0 = arith.constant 0 : i32
    return %arg0, %c0_i32 : i32, i32
  }
  func.func @transform_2(%arg0: i32) -> (i32, i32) {
    %c0_i32 = arith.constant 0 : i32
    %c0_i32_0 = arith.constant 0 : i32
    %c0_i32_1 = arith.constant 0 : i32
    return %c0_i32, %c0_i32_0 : i32, i32
  }
  func.func @transform_3(%arg0: i32) -> (i32, i32) {
    %c0_i32 = arith.constant 0 : i32
    %c0_i32_0 = arith.constant 0 : i32
    %c0_i32_1 = arith.constant 0 : i32
    return %c0_i32, %c0_i32_0 : i32, i32
  }
  func.func @transform_4(%arg0: i32) -> (i32, i32) {
    %c0_i32 = arith.constant 0 : i32
    %c0_i32_0 = arith.constant 0 : i32
    %c0_i32_1 = arith.constant 0 : i32
    return %c0_i32, %c0_i32_0 : i32, i32
  }
  func.func @transform_5(%arg0: i32) -> (i32, i32) {
    %c0_i32 = arith.constant 0 : i32
    %c0_i32_0 = arith.constant 0 : i32
    %c0_i32_1 = arith.constant 0 : i32
    return %c0_i32, %c0_i32_0 : i32, i32
  }
  func.func @transform_6(%arg0: i32) -> (i32, i32) {
    %c0_i32 = arith.constant 0 : i32
    %c0_i32_0 = arith.constant 0 : i32
    %c0_i32_1 = arith.constant 0 : i32
    return %c0_i32, %c0_i32_0 : i32, i32
  }
  func.func @transform_7(%arg0: i32) -> (i32, i32) {
    %c0_i32 = arith.constant 0 : i32
    %c0_i32_0 = arith.constant 0 : i32
    %c0_i32_1 = arith.constant 0 : i32
    return %c0_i32, %c0_i32_0 : i32, i32
  }
  func.func @transform_8(%arg0: i32) -> (i32, i32) {
    %c0_i32 = arith.constant 0 : i32
    %c0_i32_0 = arith.constant 0 : i32
    %c0_i32_1 = arith.constant 0 : i32
    return %c0_i32, %c0_i32_0 : i32, i32
  }
  func.func @transform_9(%arg0: i32) -> (i32, i32) {
    %c0_i32 = arith.constant 0 : i32
    %c0_i32_0 = arith.constant 0 : i32
    %c0_i32_1 = arith.constant 0 : i32
    return %c0_i32, %c0_i32_0 : i32, i32
  }
  func.func @transform_10(%arg0: i32) -> (i32, i32) {
    %c0_i32 = arith.constant 0 : i32
    %c0_i32_0 = arith.constant 0 : i32
    %c0_i32_1 = arith.constant 0 : i32
    return %c0_i32, %c0_i32_0 : i32, i32
  }
  func.func @transform_11(%arg0: i32) -> (i32, i32) {
    %c0_i32 = arith.constant 0 : i32
    %c0_i32_0 = arith.constant 0 : i32
    %c0_i32_1 = arith.constant 0 : i32
    return %c0_i32, %c0_i32_0 : i32, i32
  }
  func.func @transform_12(%arg0: i32) -> (i32, i32) {
    %c0_i32 = arith.constant 0 : i32
    %c0_i32_0 = arith.constant 0 : i32
    %c0_i32_1 = arith.constant 0 : i32
    return %c0_i32, %c0_i32_0 : i32, i32
  }
  func.func @transform_13(%arg0: i32) -> (i32, i32) {
    %c0_i32 = arith.constant 0 : i32
    %c0_i32_0 = arith.constant 0 : i32
    return %arg0, %c0_i32 : i32, i32
  }
}

</mosaic_0001>

<llo_original>
// kernel: tpu_custom_call.1
$region0: #{tpu_custom_call.1}
  #allocation0 [shape = 'u32[]', space=smem, size = 0x4, offset = 0x4, fixed_abs, tag = 'smem constant byte address 0x4 - core index']
  #allocation1 [shape = 'u32[144,128]{1,0:T(1,128)}', space=vmem, size = 0x12000, scoped, tag = 'internal scratch']
  #allocation2 [shape = 'f32[1]{0:T(128)S(6)}', space=smem, size = 0x200, scoped, tag = 'scoped memory for tpu_custom_call.1']
  %s0 = inlined_call_operand.<no memory space> [shape: f32[1], index: 0, kind: input, shape index: {}]
  %s1 = inlined_call_operand.hbm [shape: f32[8,32], index: 1, kind: input, shape index: {}]
  %s2 = inlined_call_operand.hbm [shape: bf16[32,256], index: 2, kind: input, shape index: {}]
  %s3 = inlined_call_operand.vmem [shape: f32[1,256], index: 3, kind: input, shape index: {}]
  %s4 = inlined_call_operand.hbm [shape: bf16[256,256], index: 4, kind: input, shape index: {}]
  %s5 = inlined_call_operand.vmem [shape: f32[1,256], index: 5, kind: input, shape index: {}]
  %s6 = inlined_call_operand.hbm [shape: bf16[256,384], index: 6, kind: input, shape index: {}]
  %s7 = inlined_call_operand.vmem [shape: f32[1,384], index: 7, kind: input, shape index: {}]
  %s8 = inlined_call_operand.vmem [shape: f32[1,128], index: 8, kind: input, shape index: {}]
  %s9 = inlined_call_operand.hbm [shape: bf16[256,256], index: 9, kind: input, shape index: {}]
  %s10 = inlined_call_operand.vmem [shape: f32[1,256], index: 10, kind: input, shape index: {}]
  %s11 = inlined_call_operand.hbm [shape: bf16[256,128], index: 11, kind: input, shape index: {}]
  %s12 = inlined_call_operand.vmem [shape: f32[1,128], index: 12, kind: input, shape index: {}]
  %s13 = inlined_call_operand.hbm [shape: bf16[8,128], index: 13, kind: output, shape index: {}]
  %s14 = sld [smem:[#allocation0]]
  $region86: #{tpu_custom_call.1} parent=0
    _
  %s16 = ssub.s32 1, %s14
  %s17 = scalar_select 0, %s16, %s14
  %18 = sst [smem:[#allocation2]] %s0
  $region1: #{tpu_custom_call.1} parent=0
    #allocation3 [shape = 'u8[4096]{0}', space=vmem, size = 0x1000, scoped, tag = 'input window, operand 1, single buffered']
    #allocation4 [shape = 's32[1]{0}', space=sflag, size = 0x4, scoped, tag = 'scoped memory for tpu_custom_call.1']
    #allocation5 [shape = 's32[1]{0}', space=sflag, size = 0x4, scoped, tag = 'scoped memory for tpu_custom_call.1']
    #allocation6 [shape = 'u8[16384]{0}', space=vmem, size = 0x4000, scoped, tag = 'input window, operand 2, single buffered']
    #allocation7 [shape = 's32[1]{0}', space=sflag, size = 0x4, scoped, tag = 'scoped memory for tpu_custom_call.1']
    #allocation8 [shape = 'u8[131072]{0}', space=vmem, size = 0x20000, scoped, tag = 'input window, operand 4, single buffered']
    #allocation9 [shape = 'u8[196608]{0}', space=vmem, size = 0x30000, scoped, tag = 'input window, operand 6, single buffered']
    #allocation10 [shape = 's32[1]{0}', space=sflag, size = 0x4, scoped, tag = 'scoped memory for tpu_custom_call.1']
    #allocation11 [shape = 'u8[131072]{0}', space=vmem, size = 0x20000, scoped, tag = 'input window, operand 9, single buffered']
    #allocation12 [shape = 'u8[65536]{0}', space=vmem, size = 0x10000, scoped, tag = 'input window, operand 11, single buffered']
    #allocation13 [shape = 's32[1]{0}', space=sflag, size = 0x4, scoped, tag = 'scoped memory for tpu_custom_call.1']
    #allocation14 [shape = 'u8[2048]{0}', space=vmem, size = 0x800, scoped, tag = 'output window, operand 0, single buffered']
    %19 = vsyncpa [#allocation4], 0
    %20 = vsyncpa [#allocation7], 0
    %21 = vsyncpa [#allocation10], 0
    %22 = vsyncpa [#allocation13], 0
    %23 = vsyncpa [#allocation5], 0
    // Predicated region
    $region2: #{tpu_custom_call.1} parent=1 // pred_check
      _
    $region3: #{tpu_custom_call.1} parent=1 // pred_check_branch
      %25 = sbr.rel (0) target = $region5
    $region4: #{tpu_custom_call.1} parent=1 // pred_region
      _
    $region5: #{tpu_custom_call.1} parent=1 // pred_fallthru
      _
    // Predicated region
    $region6: #{tpu_custom_call.1} parent=1 // pred_check
      _
    $region7: #{tpu_custom_call.1} parent=1 // pred_check_branch
      %27 = sbr.rel (0) target = $region9
    $region8: #{tpu_custom_call.1} parent=1 // pred_region
      %s29 = ssub.s32 128, 128
      %30 = vsyncadd [#allocation4], %s29
      %s32 = sshll.u32 [#allocation3], 4
      %s33 = int_to_ptr.vmem [resolvable:$true] %s32
      %35 = dma.hbm_to_vmem [thread:$0]  %s1, 128, %s33, [#allocation4]
    $region9: #{tpu_custom_call.1} parent=1 // pred_fallthru
      _
    // Predicated region
    $region10: #{tpu_custom_call.1} parent=1 // pred_check
      _
    $region11: #{tpu_custom_call.1} parent=1 // pred_check_branch
      %37 = sbr.rel (0) target = $region13
    $region12: #{tpu_custom_call.1} parent=1 // pred_region
      %s39 = ssub.s32 512, 512
      %40 = vsyncadd [#allocation7], %s39
      %s41 = sshll.u32 [#allocation6], 4
      %s42 = int_to_ptr.vmem [resolvable:$true] %s41
      %47 = dma.hbm_to_vmem [thread:$0]  %s2, 512, %s42, [#allocation7], 128, 128, 8
    $region13: #{tpu_custom_call.1} parent=1 // pred_fallthru
      _
    // Predicated region
    $region14: #{tpu_custom_call.1} parent=1 // pred_check
      _
    $region15: #{tpu_custom_call.1} parent=1 // pred_check_branch
      %49 = sbr.rel (0) target = $region17
    $region16: #{tpu_custom_call.1} parent=1 // pred_region
      _
    $region17: #{tpu_custom_call.1} parent=1 // pred_fallthru
      _
    // Predicated region
    $region18: #{tpu_custom_call.1} parent=1 // pred_check
      _
    $region19: #{tpu_custom_call.1} parent=1 // pred_check_branch
      %51 = sbr.rel (0) target = $region21
    $region20: #{tpu_custom_call.1} parent=1 // pred_region
      %s53 = ssub.s32 4096, 4096
      %54 = vsyncadd [#allocation7], %s53
      %s55 = sshll.u32 [#allocation8], 4
      %s56 = int_to_ptr.vmem [resolvable:$true] %s55
      %61 = dma.hbm_to_vmem [thread:$0]  %s4, 4096, %s56, [#allocation7], 128, 128, 8
    $region21: #{tpu_custom_call.1} parent=1 // pred_fallthru
      _
    // Predicated region
    $region22: #{tpu_custom_call.1} parent=1 // pred_check
      _
    $region23: #{tpu_custom_call.1} parent=1 // pred_check_branch
      %63 = sbr.rel (0) target = $region25
    $region24: #{tpu_custom_call.1} parent=1 // pred_region
      _
    $region25: #{tpu_custom_call.1} parent=1 // pred_fallthru
      _
    // Predicated region
    $region26: #{tpu_custom_call.1} parent=1 // pred_check
      _
    $region27: #{tpu_custom_call.1} parent=1 // pred_check_branch
      %65 = sbr.rel (0) target = $region29
    $region28: #{tpu_custom_call.1} parent=1 // pred_region
      %s67 = ssub.s32 6144, 6144
      %68 = vsyncadd [#allocation10], %s67
      %s69 = sshll.u32 [#allocation9], 4
      %s70 = int_to_ptr.vmem [resolvable:$true] %s69
      %75 = dma.hbm_to_vmem [thread:$0]  %s6, 6144, %s70, [#allocation10], 192, 192, 12
    $region29: #{tpu_custom_call.1} parent=1 // pred_fallthru
      _
    // Predicated region
    $region30: #{tpu_custom_call.1} parent=1 // pred_check
      _
    $region31: #{tpu_custom_call.1} parent=1 // pred_check_branch
      %77 = sbr.rel (0) target = $region33
    $region32: #{tpu_custom_call.1} parent=1 // pred_region
      _
    $region33: #{tpu_custom_call.1} parent=1 // pred_fallthru
      _
    // Predicated region
    $region34: #{tpu_custom_call.1} parent=1 // pred_check
      _
    $region35: #{tpu_custom_call.1} parent=1 // pred_check_branch
      %79 = sbr.rel (0) target = $region37
    $region36: #{tpu_custom_call.1} parent=1 // pred_region
      _
    $region37: #{tpu_custom_call.1} parent=1 // pred_fallthru
      _
    // Predicated region
    $region38: #{tpu_custom_call.1} parent=1 // pred_check
      _
    $region39: #{tpu_custom_call.1} parent=1 // pred_check_branch
      %81 = sbr.rel (0) target = $region41
    $region40: #{tpu_custom_call.1} parent=1 // pred_region
      %s83 = ssub.s32 4096, 4096
      %84 = vsyncadd [#allocation10], %s83
      %s85 = sshll.u32 [#allocation11], 4
      %s86 = int_to_ptr.vmem [resolvable:$true] %s85
      %91 = dma.hbm_to_vmem [thread:$0]  %s9, 4096, %s86, [#allocation10], 128, 128, 8
    $region41: #{tpu_custom_call.1} parent=1 // pred_fallthru
      _
    // Predicated region
    $region42: #{tpu_custom_call.1} parent=1 // pred_check
      _
    $region43: #{tpu_custom_call.1} parent=1 // pred_check_branch
      %93 = sbr.rel (0) target = $region45
    $region44: #{tpu_custom_call.1} parent=1 // pred_region
      _
    $region45: #{tpu_custom_call.1} parent=1 // pred_fallthru
      _
    // Predicated region
    $region46: #{tpu_custom_call.1} parent=1 // pred_check
      _
    $region47: #{tpu_custom_call.1} parent=1 // pred_check_branch
      %95 = sbr.rel (0) target = $region49
    $region48: #{tpu_custom_call.1} parent=1 // pred_region
      %s97 = ssub.s32 2048, 2048
      %98 = vsyncadd [#allocation13], %s97
      %s99 = sshll.u32 [#allocation12], 4
      %s100 = int_to_ptr.vmem [resolvable:$true] %s99
      %105 = dma.hbm_to_vmem [thread:$0]  %s11, 2048, %s100, [#allocation13], 64, 64, 4
    $region49: #{tpu_custom_call.1} parent=1 // pred_fallthru
      _
    // Predicated region
    $region50: #{tpu_custom_call.1} parent=1 // pred_check
      _
    $region51: #{tpu_custom_call.1} parent=1 // pred_check_branch
      %107 = sbr.rel (0) target = $region53
    $region52: #{tpu_custom_call.1} parent=1 // pred_region
      _
    $region53: #{tpu_custom_call.1} parent=1 // pred_fallthru
      _
    // Predicated region
    $region54: #{tpu_custom_call.1} parent=1 // pred_check
      _
    $region55: #{tpu_custom_call.1} parent=1 // pred_check_branch
      %109 = sbr.rel (0) target = $region57
    $region56: #{tpu_custom_call.1} parent=1 // pred_region
      %110 = dma.done [#allocation4], 128
    $region57: #{tpu_custom_call.1} parent=1 // pred_fallthru
      _
    // Predicated region
    $region58: #{tpu_custom_call.1} parent=1 // pred_check
      _
    $region59: #{tpu_custom_call.1} parent=1 // pred_check_branch
      %112 = sbr.rel (0) target = $region61
    $region60: #{tpu_custom_call.1} parent=1 // pred_region
      %113 = dma.done [#allocation7], 512
    $region61: #{tpu_custom_call.1} parent=1 // pred_fallthru
      _
    // Predicated region
    $region62: #{tpu_custom_call.1} parent=1 // pred_check
      _
    $region63: #{tpu_custom_call.1} parent=1 // pred_check_branch
      %115 = sbr.rel (0) target = $region65
    $region64: #{tpu_custom_call.1} parent=1 // pred_region
      %116 = dma.done [#allocation7], 4096
    $region65: #{tpu_custom_call.1} parent=1 // pred_fallthru
      _
    // Predicated region
    $region66: #{tpu_custom_call.1} parent=1 // pred_check
      _
    $region67: #{tpu_custom_call.1} parent=1 // pred_check_branch
      %118 = sbr.rel (0) target = $region69
    $region68: #{tpu_custom_call.1} parent=1 // pred_region
      %119 = dma.done [#allocation10], 6144
    $region69: #{tpu_custom_call.1} parent=1 // pred_fallthru
      _
    // Predicated region
    $region70: #{tpu_custom_call.1} parent=1 // pred_check
      _
    $region71: #{tpu_custom_call.1} parent=1 // pred_check_branch
      %121 = sbr.rel (0) target = $region73
    $region72: #{tpu_custom_call.1} parent=1 // pred_region
      %122 = dma.done [#allocation10], 4096
    $region73: #{tpu_custom_call.1} parent=1 // pred_fallthru
      _
    // Predicated region
    $region74: #{tpu_custom_call.1} parent=1 // pred_check
      _
    $region75: #{tpu_custom_call.1} parent=1 // pred_check_branch
      %124 = sbr.rel (0) target = $region77
    $region76: #{tpu_custom_call.1} parent=1 // pred_region
      %125 = dma.done [#allocation13], 2048
    $region77: #{tpu_custom_call.1} parent=1 // pred_fallthru
      _
    %v127 = vld [vmem:[#allocation3] sm:$0xff]
    %v128 = vpack.c.bf16 %v127, %v127
    %v129 = vld [vmem:[#allocation6] sm:$0xff]
    %v130 = vld [vmem:[#allocation6 + $0x8] sm:$0xff]
    %v131 = vld [vmem:[#allocation6 + $0x10] sm:$0xff]
    %v132 = vld [vmem:[#allocation6 + $0x18] sm:$0xff]
    %v133 = vld [vmem:[%s3] sm:$0x3]
    %v135 = vlaneseq
    %v136 = vshrl.u32 %v135, 7
    %v137 = vsub.s32 0, %v136
    %v138 = vrot.slane %v133, %v137
    %v139 = vlaneseq
    %v140 = vshrl.u32 %v139, 7
    %v141 = vsub.s32 1, %v140
    %v142 = vrot.slane %v133, %v141
    %v149 = vunpack.c.l.b16 %v129
    %v150 = vunpack.c.h.b16 %v129
    %v151 = vunpack.c.l.b16 %v130
    %v152 = vunpack.c.h.b16 %v130
    %v153 = vunpack.c.l.b16 %v131
    %v154 = vunpack.c.h.b16 %v131
    %v155 = vunpack.c.l.b16 %v132
    %v156 = vunpack.c.h.b16 %v132
    %v157 = vpack.c.b16 %v151, %v149
    %v158 = vpack.c.b16 %v152, %v150
    %v159 = vpack.c.b16 %v155, %v153
    %v160 = vpack.c.b16 %v156, %v154
    %vm165 = vcmask 261120
    %v167 = vsel %vm165, %v128, 0
    %169 = vmatprep.subr.bf16.mxu0 %v158
    %170 = vmatpush1.bf16.msra.mxu0 %v157
    %171 = vmatprep.subr.bf16.mxu0 %v160
    %172 = vmatpush1.bf16.msra.mxu0 %v159
    %173 = vmatprep.subr.bf16.mxu0 0
    %174 = vmatpush1.bf16.msra.mxu0 0
    %175 = vmatprep.subr.bf16.mxu0 0
    %176 = vmatpush1.bf16.msra.mxu0 0
    %177 = vmatprep.subr.bf16.mxu0 0
    %178 = vmatpush1.bf16.msra.mxu0 0
    %179 = vmatprep.subr.bf16.mxu0 0
    %180 = vmatpush1.bf16.msra.mxu0 0
    %181 = vmatprep.subr.bf16.mxu0 0
    %182 = vmatpush1.bf16.msra.mxu0 0
    %183 = vmatprep.subr.bf16.mxu0 0
    %184 = vmatpush1.bf16.msra.mxu0 0
    %185 = vmatprep.subr.bf16.mxu0 0
    %186 = vmatpush1.bf16.msra.mxu0 0
    %187 = vmatprep.subr.bf16.mxu0 0
    %188 = vmatpush1.bf16.msra.mxu0 0
    %189 = vmatprep.subr.bf16.mxu0 0
    %190 = vmatpush1.bf16.msra.mxu0 0
    %191 = vmatprep.subr.bf16.mxu0 0
    %192 = vmatpush1.bf16.msra.mxu0 0
    %193 = vmatprep.subr.bf16.mxu0 0
    %194 = vmatpush1.bf16.msra.mxu0 0
    %195 = vmatprep.subr.bf16.mxu0 0
    %196 = vmatpush1.bf16.msra.mxu0 0
    %197 = vmatprep.subr.bf16.mxu0 0
    %198 = vmatpush1.bf16.msra.mxu0 0
    %199 = vmatprep.subr.bf16.mxu0 0
    %200 = vmatpush1.bf16.msra.mxu0 0
    %201 = vmatprep.mubr.bf16.mxu0 0
    %202 = vmatmul.mubr.bf16.gmra.mrb[0].mxu0 %v167
    %v203 = vpop.f32.mrb[0].mxu0
    %v204 = vadd.f32 %v138, %v203
    %v205 = vpop.f32.mrb[0].mxu0
    %v206 = vadd.f32 %v142, %v205
    %v207 = vpop.f32.mrb[0].mxu0
    %v208 = vpop.f32.mrb[0].mxu0
    %209 = vdwg.mxu0
    %v210 = vmax.f32 %v204, 0.0
    %v211 = vmax.f32 %v206, 0.0
    %v212 = vpack.c.bf16 %v210, %v210
    %v213 = vpack.c.bf16 %v211, %v211
    %v214 = vld [vmem:[#allocation8] sm:$0xff]
    %v215 = vld [vmem:[#allocation8 + $0x8] sm:$0xff]
    %v216 = vld [vmem:[#allocation8 + $0x10] sm:$0xff]
    %v217 = vld [vmem:[#allocation8 + $0x18] sm:$0xff]
    %v218 = vld [vmem:[#allocation8 + $0x20] sm:$0xff]
    %v219 = vld [vmem:[#allocation8 + $0x28] sm:$0xff]
    %v220 = vld [vmem:[#allocation8 + $0x30] sm:$0xff]
    %v221 = vld [vmem:[#allocation8 + $0x38] sm:$0xff]
    %v222 = vld [vmem:[#allocation8 + $0x40] sm:$0xff]
    %v223 = vld [vmem:[#allocation8 + $0x48] sm:$0xff]
    %v224 = vld [vmem:[#allocation8 + $0x50] sm:$0xff]
    %v225 = vld [vmem:[#allocation8 + $0x58] sm:$0xff]
    %v226 = vld [vmem:[#allocation8 + $0x60] sm:$0xff]
    %v227 = vld [vmem:[#allocation8 + $0x68] sm:$0xff]
    %v228 = vld [vmem:[#allocation8 + $0x70] sm:$0xff]
    %v229 = vld [vmem:[#allocation8 + $0x78] sm:$0xff]
    %v230 = vld [vmem:[#allocation8 + $0x80] sm:$0xff]
    %v231 = vld [vmem:[#allocation8 + $0x88] sm:$0xff]
    %v232 = vld [vmem:[#allocation8 + $0x90] sm:$0xff]
    %v233 = vld [vmem:[#allocation8 + $0x98] sm:$0xff]
    %v234 = vld [vmem:[#allocation8 + $0xa0] sm:$0xff]
    %v235 = vld [vmem:[#allocation8 + $0xa8] sm:$0xff]
    %v236 = vld [vmem:[#allocation8 + $0xb0] sm:$0xff]
    %v237 = vld [vmem:[#allocation8 + $0xb8] sm:$0xff]
    %v238 = vld [vmem:[#allocation8 + $0xc0] sm:$0xff]
    %v239 = vld [vmem:[#allocation8 + $0xc8] sm:$0xff]
    %v240 = vld [vmem:[#allocation8 + $0xd0] sm:$0xff]
    %v241 = vld [vmem:[#allocation8 + $0xd8] sm:$0xff]
    %v242 = vld [vmem:[#allocation8 + $0xe0] sm:$0xff]
    %v243 = vld [vmem:[#allocation8 + $0xe8] sm:$0xff]
    %v244 = vld [vmem:[#allocation8 + $0xf0] sm:$0xff]
    %v245 = vld [vmem:[#allocation8 + $0xf8] sm:$0xff]
    %v246 = vld [vmem:[%s5] sm:$0x3]
    %v248 = vlaneseq
    %v249 = vshrl.u32 %v248, 7
    %v250 = vsub.s32 0, %v249
    %v251 = vrot.slane %v246, %v250
    %v252 = vlaneseq
    %v253 = vshrl.u32 %v252, 7
    %v254 = vsub.s32 1, %v253
    %v255 = vrot.slane %v246, %v254
    %v290 = vunpack.c.l.b16 %v214
    %v291 = vunpack.c.h.b16 %v214
    %v292 = vunpack.c.l.b16 %v215
    %v293 = vunpack.c.h.b16 %v215
    %v294 = vunpack.c.l.b16 %v216
    %v295 = vunpack.c.h.b16 %v216
    %v296 = vunpack.c.l.b16 %v217
    %v297 = vunpack.c.h.b16 %v217
    %v298 = vunpack.c.l.b16 %v218
    %v299 = vunpack.c.h.b16 %v218
    %v300 = vunpack.c.l.b16 %v219
    %v301 = vunpack.c.h.b16 %v219
    %v302 = vunpack.c.l.b16 %v220
    %v303 = vunpack.c.h.b16 %v220
    %v304 = vunpack.c.l.b16 %v221
    %v305 = vunpack.c.h.b16 %v221
    %v306 = vunpack.c.l.b16 %v222
    %v307 = vunpack.c.h.b16 %v222
    %v308 = vunpack.c.l.b16 %v223
    %v309 = vunpack.c.h.b16 %v223
    %v310 = vunpack.c.l.b16 %v224
    %v311 = vunpack.c.h.b16 %v224
    %v312 = vunpack.c.l.b16 %v225
    %v313 = vunpack.c.h.b16 %v225
    %v314 = vunpack.c.l.b16 %v226
    %v315 = vunpack.c.h.b16 %v226
    %v316 = vunpack.c.l.b16 %v227
    %v317 = vunpack.c.h.b16 %v227
    %v318 = vunpack.c.l.b16 %v228
    %v319 = vunpack.c.h.b16 %v228
    %v320 = vunpack.c.l.b16 %v229
    %v321 = vunpack.c.h.b16 %v229
    %v322 = vunpack.c.l.b16 %v230
    %v323 = vunpack.c.h.b16 %v230
    %v324 = vunpack.c.l.b16 %v231
    %v325 = vunpack.c.h.b16 %v231
    %v326 = vunpack.c.l.b16 %v232
    %v327 = vunpack.c.h.b16 %v232
    %v328 = vunpack.c.l.b16 %v233
    %v329 = vunpack.c.h.b16 %v233
    %v330 = vunpack.c.l.b16 %v234
    %v331 = vunpack.c.h.b16 %v234
    %v332 = vunpack.c.l.b16 %v235
    %v333 = vunpack.c.h.b16 %v235
    %v334 = vunpack.c.l.b16 %v236
    %v335 = vunpack.c.h.b16 %v236
    %v336 = vunpack.c.l.b16 %v237
    %v337 = vunpack.c.h.b16 %v237
    %v338 = vunpack.c.l.b16 %v238
    %v339 = vunpack.c.h.b16 %v238
    %v340 = vunpack.c.l.b16 %v239
    %v341 = vunpack.c.h.b16 %v239
    %v342 = vunpack.c.l.b16 %v240
    %v343 = vunpack.c.h.b16 %v240
    %v344 = vunpack.c.l.b16 %v241
    %v345 = vunpack.c.h.b16 %v241
    %v346 = vunpack.c.l.b16 %v242
    %v347 = vunpack.c.h.b16 %v242
    %v348 = vunpack.c.l.b16 %v243
    %v349 = vunpack.c.h.b16 %v243
    %v350 = vunpack.c.l.b16 %v244
    %v351 = vunpack.c.h.b16 %v244
    %v352 = vunpack.c.l.b16 %v245
    %v353 = vunpack.c.h.b16 %v245
    %v354 = vpack.c.b16 %v292, %v290
    %v355 = vpack.c.b16 %v293, %v291
    %v356 = vpack.c.b16 %v296, %v294
    %v357 = vpack.c.b16 %v297, %v295
    %v358 = vpack.c.b16 %v300, %v298
    %v359 = vpack.c.b16 %v301, %v299
    %v360 = vpack.c.b16 %v304, %v302
    %v361 = vpack.c.b16 %v305, %v303
    %v362 = vpack.c.b16 %v308, %v306
    %v363 = vpack.c.b16 %v309, %v307
    %v364 = vpack.c.b16 %v312, %v310
    %v365 = vpack.c.b16 %v313, %v311
    %v366 = vpack.c.b16 %v316, %v314
    %v367 = vpack.c.b16 %v317, %v315
    %v368 = vpack.c.b16 %v320, %v318
    %v369 = vpack.c.b16 %v321, %v319
    %v370 = vpack.c.b16 %v324, %v322
    %v371 = vpack.c.b16 %v325, %v323
    %v372 = vpack.c.b16 %v328, %v326
    %v373 = vpack.c.b16 %v329, %v327
    %v374 = vpack.c.b16 %v332, %v330
    %v375 = vpack.c.b16 %v333, %v331
    %v376 = vpack.c.b16 %v336, %v334
    %v377 = vpack.c.b16 %v337, %v335
    %v378 = vpack.c.b16 %v340, %v338
    %v379 = vpack.c.b16 %v341, %v339
    %v380 = vpack.c.b16 %v344, %v342
    %v381 = vpack.c.b16 %v345, %v343
    %v382 = vpack.c.b16 %v348, %v346
    %v383 = vpack.c.b16 %v349, %v347
    %v384 = vpack.c.b16 %v352, %v350
    %v385 = vpack.c.b16 %v353, %v351
    %418 = vmatprep.subr.bf16.mxu0 %v355
    %419 = vmatpush1.bf16.msra.mxu0 %v354
    %420 = vmatprep.subr.bf16.mxu0 %v357
    %421 = vmatpush1.bf16.msra.mxu0 %v356
    %422 = vmatprep.subr.bf16.mxu0 %v359
    %423 = vmatpush1.bf16.msra.mxu0 %v358
    %424 = vmatprep.subr.bf16.mxu0 %v361
    %425 = vmatpush1.bf16.msra.mxu0 %v360
    %426 = vmatprep.subr.bf16.mxu0 %v363
    %427 = vmatpush1.bf16.msra.mxu0 %v362
    %428 = vmatprep.subr.bf16.mxu0 %v365
    %429 = vmatpush1.bf16.msra.mxu0 %v364
    %430 = vmatprep.subr.bf16.mxu0 %v367
    %431 = vmatpush1.bf16.msra.mxu0 %v366
    %432 = vmatprep.subr.bf16.mxu0 %v369
    %433 = vmatpush1.bf16.msra.mxu0 %v368
    %434 = vmatprep.subr.bf16.mxu0 %v371
    %435 = vmatpush1.bf16.msra.mxu0 %v370
    %436 = vmatprep.subr.bf16.mxu0 %v373
    %437 = vmatpush1.bf16.msra.mxu0 %v372
    %438 = vmatprep.subr.bf16.mxu0 %v375
    %439 = vmatpush1.bf16.msra.mxu0 %v374
    %440 = vmatprep.subr.bf16.mxu0 %v377
    %441 = vmatpush1.bf16.msra.mxu0 %v376
    %442 = vmatprep.subr.bf16.mxu0 %v379
    %443 = vmatpush1.bf16.msra.mxu0 %v378
    %444 = vmatprep.subr.bf16.mxu0 %v381
    %445 = vmatpush1.bf16.msra.mxu0 %v380
    %446 = vmatprep.subr.bf16.mxu0 %v383
    %447 = vmatpush1.bf16.msra.mxu0 %v382
    %448 = vmatprep.subr.bf16.mxu0 %v385
    %449 = vmatpush1.bf16.msra.mxu0 %v384
    %450 = vmatprep.mubr.bf16.mxu0 %v213
    %451 = vmatmul.mubr.bf16.gmra.mrb[0].mxu0 %v212
    %v452 = vpop.f32.mrb[0].mxu0
    %v453 = vadd.f32 %v251, %v452
    %v454 = vpop.f32.mrb[0].mxu0
    %v455 = vadd.f32 %v255, %v454
    %v456 = vpop.f32.mrb[0].mxu0
    %v457 = vpop.f32.mrb[0].mxu0
    %458 = vdwg.mxu0
    %v459 = vmax.f32 %v453, 0.0
    %v460 = vmax.f32 %v455, 0.0
    %v461 = vpack.c.bf16 %v459, %v459
    %v462 = vpack.c.bf16 %v460, %v460
    %v463 = vld [vmem:[#allocation9] sm:$0xff]
    %v464 = vld [vmem:[#allocation9 + $0x8] sm:$0xf]
    %v465 = vld [vmem:[#allocation9 + $0xc] sm:$0xff]
    %v466 = vld [vmem:[#allocation9 + $0x14] sm:$0xf]
    %v467 = vld [vmem:[#allocation9 + $0x18] sm:$0xff]
    %v468 = vld [vmem:[#allocation9 + $0x20] sm:$0xf]
    %v469 = vld [vmem:[#allocation9 + $0x24] sm:$0xff]
    %v470 = vld [vmem:[#allocation9 + $0x2c] sm:$0xf]
    %v471 = vld [vmem:[#allocation9 + $0x30] sm:$0xff]
    %v472 = vld [vmem:[#allocation9 + $0x38] sm:$0xf]
    %v473 = vld [vmem:[#allocation9 + $0x3c] sm:$0xff]
    %v474 = vld [vmem:[#allocation9 + $0x44] sm:$0xf]
    %v475 = vld [vmem:[#allocation9 + $0x48] sm:$0xff]
    %v476 = vld [vmem:[#allocation9 + $0x50] sm:$0xf]
    %v477 = vld [vmem:[#allocation9 + $0x54] sm:$0xff]
    %v478 = vld [vmem:[#allocation9 + $0x5c] sm:$0xf]
    %v479 = vld [vmem:[#allocation9 + $0x60] sm:$0xff]
    %v480 = vld [vmem:[#allocation9 + $0x68] sm:$0xf]
    %v481 = vld [vmem:[#allocation9 + $0x6c] sm:$0xff]
    %v482 = vld [vmem:[#allocation9 + $0x74] sm:$0xf]
    %v483 = vld [vmem:[#allocation9 + $0x78] sm:$0xff]
    %v484 = vld [vmem:[#allocation9 + $0x80] sm:$0xf]
    %v485 = vld [vmem:[#allocation9 + $0x84] sm:$0xff]
    %v486 = vld [vmem:[#allocation9 + $0x8c] sm:$0xf]
    %v487 = vld [vmem:[#allocation9 + $0x90] sm:$0xff]
    %v488 = vld [vmem:[#allocation9 + $0x98] sm:$0xf]
    %v489 = vld [vmem:[#allocation9 + $0x9c] sm:$0xff]
    %v490 = vld [vmem:[#allocation9 + $0xa4] sm:$0xf]
    %v491 = vld [vmem:[#allocation9 + $0xa8] sm:$0xff]
    %v492 = vld [vmem:[#allocation9 + $0xb0] sm:$0xf]
    %v493 = vld [vmem:[#allocation9 + $0xb4] sm:$0xff]
    %v494 = vld [vmem:[#allocation9 + $0xbc] sm:$0xf]
    %v495 = vld [vmem:[#allocation9 + $0xc0] sm:$0xff]
    %v496 = vld [vmem:[#allocation9 + $0xc8] sm:$0xf]
    %v497 = vld [vmem:[#allocation9 + $0xcc] sm:$0xff]
    %v498 = vld [vmem:[#allocation9 + $0xd4] sm:$0xf]
    %v499 = vld [vmem:[#allocation9 + $0xd8] sm:$0xff]
    %v500 = vld [vmem:[#allocation9 + $0xe0] sm:$0xf]
    %v501 = vld [vmem:[#allocation9 + $0xe4] sm:$0xff]
    %v502 = vld [vmem:[#allocation9 + $0xec] sm:$0xf]
    %v503 = vld [vmem:[#allocation9 + $0xf0] sm:$0xff]
    %v504 = vld [vmem:[#allocation9 + $0xf8] sm:$0xf]
    %v505 = vld [vmem:[#allocation9 + $0xfc] sm:$0xff]
    %v506 = vld [vmem:[#allocation9 + $0x104] sm:$0xf]
    %v507 = vld [vmem:[#allocation9 + $0x108] sm:$0xff]
    %v508 = vld [vmem:[#allocation9 + $0x110] sm:$0xf]
    %v509 = vld [vmem:[#allocation9 + $0x114] sm:$0xff]
    %v510 = vld [vmem:[#allocation9 + $0x11c] sm:$0xf]
    %v511 = vld [vmem:[#allocation9 + $0x120] sm:$0xff]
    %v512 = vld [vmem:[#allocation9 + $0x128] sm:$0xf]
    %v513 = vld [vmem:[#allocation9 + $0x12c] sm:$0xff]
    %v514 = vld [vmem:[#allocation9 + $0x134] sm:$0xf]
    %v515 = vld [vmem:[#allocation9 + $0x138] sm:$0xff]
    %v516 = vld [vmem:[#allocation9 + $0x140] sm:$0xf]
    %v517 = vld [vmem:[#allocation9 + $0x144] sm:$0xff]
    %v518 = vld [vmem:[#allocation9 + $0x14c] sm:$0xf]
    %v519 = vld [vmem:[#allocation9 + $0x150] sm:$0xff]
    %v520 = vld [vmem:[#allocation9 + $0x158] sm:$0xf]
    %v521 = vld [vmem:[#allocation9 + $0x15c] sm:$0xff]
    %v522 = vld [vmem:[#allocation9 + $0x164] sm:$0xf]
    %v523 = vld [vmem:[#allocation9 + $0x168] sm:$0xff]
    %v524 = vld [vmem:[#allocation9 + $0x170] sm:$0xf]
    %v525 = vld [vmem:[#allocation9 + $0x174] sm:$0xff]
    %v526 = vld [vmem:[#allocation9 + $0x17c] sm:$0xf]
    %v527 = vld [vmem:[%s7] sm:$0x7]
    %v529 = vlaneseq
    %v530 = vshrl.u32 %v529, 7
    %v531 = vsub.s32 0, %v530
    %v532 = vrot.slane %v527, %v531
    %v533 = vlaneseq
    %v534 = vshrl.u32 %v533, 7
    %v535 = vsub.s32 1, %v534
    %v536 = vrot.slane %v527, %v535
    %v537 = vlaneseq
    %v538 = vshrl.u32 %v537, 7
    %v539 = vsub.s32 2, %v538
    %v540 = vrot.slane %v527, %v539
    %v608 = vunpack.c.l.b16 %v463
    %v609 = vunpack.c.h.b16 %v463
    %v610 = vunpack.c.l.b16 %v464
    %v611 = vunpack.c.l.b16 %v465
    %v612 = vunpack.c.h.b16 %v465
    %v613 = vunpack.c.l.b16 %v466
    %v614 = vunpack.c.l.b16 %v467
    %v615 = vunpack.c.h.b16 %v467
    %v616 = vunpack.c.l.b16 %v468
    %v617 = vunpack.c.l.b16 %v469
    %v618 = vunpack.c.h.b16 %v469
    %v619 = vunpack.c.l.b16 %v470
    %v620 = vunpack.c.l.b16 %v471
    %v621 = vunpack.c.h.b16 %v471
    %v622 = vunpack.c.l.b16 %v472
    %v623 = vunpack.c.l.b16 %v473
    %v624 = vunpack.c.h.b16 %v473
    %v625 = vunpack.c.l.b16 %v474
    %v626 = vunpack.c.l.b16 %v475
    %v627 = vunpack.c.h.b16 %v475
    %v628 = vunpack.c.l.b16 %v476
    %v629 = vunpack.c.l.b16 %v477
    %v630 = vunpack.c.h.b16 %v477
    %v631 = vunpack.c.l.b16 %v478
    %v632 = vunpack.c.l.b16 %v479
    %v633 = vunpack.c.h.b16 %v479
    %v634 = vunpack.c.l.b16 %v480
    %v635 = vunpack.c.l.b16 %v481
    %v636 = vunpack.c.h.b16 %v481
    %v637 = vunpack.c.l.b16 %v482
    %v638 = vunpack.c.l.b16 %v483
    %v639 = vunpack.c.h.b16 %v483
    %v640 = vunpack.c.l.b16 %v484
    %v641 = vunpack.c.l.b16 %v485
    %v642 = vunpack.c.h.b16 %v485
    %v643 = vunpack.c.l.b16 %v486
    %v644 = vunpack.c.l.b16 %v487
    %v645 = vunpack.c.h.b16 %v487
    %v646 = vunpack.c.l.b16 %v488
    %v647 = vunpack.c.l.b16 %v489
    %v648 = vunpack.c.h.b16 %v489
    %v649 = vunpack.c.l.b16 %v490
    %v650 = vunpack.c.l.b16 %v491
    %v651 = vunpack.c.h.b16 %v491
    %v652 = vunpack.c.l.b16 %v492
    %v653 = vunpack.c.l.b16 %v493
    %v654 = vunpack.c.h.b16 %v493
    %v655 = vunpack.c.l.b16 %v494
    %v656 = vunpack.c.l.b16 %v495
    %v657 = vunpack.c.h.b16 %v495
    %v658 = vunpack.c.l.b16 %v496
    %v659 = vunpack.c.l.b16 %v497
    %v660 = vunpack.c.h.b16 %v497
    %v661 = vunpack.c.l.b16 %v498
    %v662 = vunpack.c.l.b16 %v499
    %v663 = vunpack.c.h.b16 %v499
    %v664 = vunpack.c.l.b16 %v500
    %v665 = vunpack.c.l.b16 %v501
    %v666 = vunpack.c.h.b16 %v501
    %v667 = vunpack.c.l.b16 %v502
    %v668 = vunpack.c.l.b16 %v503
    %v669 = vunpack.c.h.b16 %v503
    %v670 = vunpack.c.l.b16 %v504
    %v671 = vunpack.c.l.b16 %v505
    %v672 = vunpack.c.h.b16 %v505
    %v673 = vunpack.c.l.b16 %v506
    %v674 = vunpack.c.l.b16 %v507
    %v675 = vunpack.c.h.b16 %v507
    %v676 = vunpack.c.l.b16 %v508
    %v677 = vunpack.c.l.b16 %v509
    %v678 = vunpack.c.h.b16 %v509
    %v679 = vunpack.c.l.b16 %v510
    %v680 = vunpack.c.l.b16 %v511
    %v681 = vunpack.c.h.b16 %v511
    %v682 = vunpack.c.l.b16 %v512
    %v683 = vunpack.c.l.b16 %v513
    %v684 = vunpack.c.h.b16 %v513
    %v685 = vunpack.c.l.b16 %v514
    %v686 = vunpack.c.l.b16 %v515
    %v687 = vunpack.c.h.b16 %v515
    %v688 = vunpack.c.l.b16 %v516
    %v689 = vunpack.c.l.b16 %v517
    %v690 = vunpack.c.h.b16 %v517
    %v691 = vunpack.c.l.b16 %v518
    %v692 = vunpack.c.l.b16 %v519
    %v693 = vunpack.c.h.b16 %v519
    %v694 = vunpack.c.l.b16 %v520
    %v695 = vunpack.c.l.b16 %v521
    %v696 = vunpack.c.h.b16 %v521
    %v697 = vunpack.c.l.b16 %v522
    %v698 = vunpack.c.l.b16 %v523
    %v699 = vunpack.c.h.b16 %v523
    %v700 = vunpack.c.l.b16 %v524
    %v701 = vunpack.c.l.b16 %v525
    %v702 = vunpack.c.h.b16 %v525
    %v703 = vunpack.c.l.b16 %v526
    %v704 = vpack.c.b16 %v611, %v608
    %v705 = vpack.c.b16 %v612, %v609
    %v706 = vpack.c.b16 %v613, %v610
    %v707 = vpack.c.b16 %v617, %v614
    %v708 = vpack.c.b16 %v618, %v615
    %v709 = vpack.c.b16 %v619, %v616
    %v710 = vpack.c.b16 %v623, %v620
    %v711 = vpack.c.b16 %v624, %v621
    %v712 = vpack.c.b16 %v625, %v622
    %v713 = vpack.c.b16 %v629, %v626
    %v714 = vpack.c.b16 %v630, %v627
    %v715 = vpack.c.b16 %v631, %v628
    %v716 = vpack.c.b16 %v635, %v632
    %v717 = vpack.c.b16 %v636, %v633
    %v718 = vpack.c.b16 %v637, %v634
    %v719 = vpack.c.b16 %v641, %v638
    %v720 = vpack.c.b16 %v642, %v639
    %v721 = vpack.c.b16 %v643, %v640
    %v722 = vpack.c.b16 %v647, %v644
    %v723 = vpack.c.b16 %v648, %v645
    %v724 = vpack.c.b16 %v649, %v646
    %v725 = vpack.c.b16 %v653, %v650
    %v726 = vpack.c.b16 %v654, %v651
    %v727 = vpack.c.b16 %v655, %v652
    %v728 = vpack.c.b16 %v659, %v656
    %v729 = vpack.c.b16 %v660, %v657
    %v730 = vpack.c.b16 %v661, %v658
    %v731 = vpack.c.b16 %v665, %v662
    %v732 = vpack.c.b16 %v666, %v663
    %v733 = vpack.c.b16 %v667, %v664
    %v734 = vpack.c.b16 %v671, %v668
    %v735 = vpack.c.b16 %v672, %v669
    %v736 = vpack.c.b16 %v673, %v670
    %v737 = vpack.c.b16 %v677, %v674
    %v738 = vpack.c.b16 %v678, %v675
    %v739 = vpack.c.b16 %v679, %v676
    %v740 = vpack.c.b16 %v683, %v680
    %v741 = vpack.c.b16 %v684, %v681
    %v742 = vpack.c.b16 %v685, %v682
    %v743 = vpack.c.b16 %v689, %v686
    %v744 = vpack.c.b16 %v690, %v687
    %v745 = vpack.c.b16 %v691, %v688
    %v746 = vpack.c.b16 %v695, %v692
    %v747 = vpack.c.b16 %v696, %v693
    %v748 = vpack.c.b16 %v697, %v694
    %v749 = vpack.c.b16 %v701, %v698
    %v750 = vpack.c.b16 %v702, %v699
    %v751 = vpack.c.b16 %v703, %v700
    %800 = vmatprep.subr.bf16.mxu0 %v705
    %801 = vmatpush1.bf16.msra.mxu0 %v704
    %802 = vmatprep.subr.bf16.mxu0 %v708
    %803 = vmatpush1.bf16.msra.mxu0 %v707
    %804 = vmatprep.subr.bf16.mxu0 %v711
    %805 = vmatpush1.bf16.msra.mxu0 %v710
    %806 = vmatprep.subr.bf16.mxu0 %v714
    %807 = vmatpush1.bf16.msra.mxu0 %v713
    %808 = vmatprep.subr.bf16.mxu0 %v717
    %809 = vmatpush1.bf16.msra.mxu0 %v716
    %810 = vmatprep.subr.bf16.mxu0 %v720
    %811 = vmatpush1.bf16.msra.mxu0 %v719
    %812 = vmatprep.subr.bf16.mxu0 %v723
    %813 = vmatpush1.bf16.msra.mxu0 %v722
    %814 = vmatprep.subr.bf16.mxu0 %v726
    %815 = vmatpush1.bf16.msra.mxu0 %v725
    %816 = vmatprep.subr.bf16.mxu0 %v729
    %817 = vmatpush1.bf16.msra.mxu0 %v728
    %818 = vmatprep.subr.bf16.mxu0 %v732
    %819 = vmatpush1.bf16.msra.mxu0 %v731
    %820 = vmatprep.subr.bf16.mxu0 %v735
    %821 = vmatpush1.bf16.msra.mxu0 %v734
    %822 = vmatprep.subr.bf16.mxu0 %v738
    %823 = vmatpush1.bf16.msra.mxu0 %v737
    %824 = vmatprep.subr.bf16.mxu0 %v741
    %825 = vmatpush1.bf16.msra.mxu0 %v740
    %826 = vmatprep.subr.bf16.mxu0 %v744
    %827 = vmatpush1.bf16.msra.mxu0 %v743
    %828 = vmatprep.subr.bf16.mxu0 %v747
    %829 = vmatpush1.bf16.msra.mxu0 %v746
    %830 = vmatprep.subr.bf16.mxu0 %v750
    %831 = vmatpush1.bf16.msra.mxu0 %v749
    %832 = vmatprep.mubr.bf16.mxu0 %v462
    %833 = vmatmul.mubr.bf16.gmra.mrb[0].mxu0 %v461
    %v834 = vpop.f32.mrb[0].mxu0
    %v835 = vadd.f32 %v532, %v834
    %v836 = vpop.f32.mrb[0].mxu0
    %v837 = vadd.f32 %v536, %v836
    %v838 = vpop.f32.mrb[0].mxu0
    %v839 = vpop.f32.mrb[0].mxu0
    %840 = vdwg.mxu0
    %841 = vmatprep.subr.bf16.mxu0 0
    %842 = vmatpush1.bf16.msra.mxu0 %v706
    %843 = vmatprep.subr.bf16.mxu0 0
    %844 = vmatpush1.bf16.msra.mxu0 %v709
    %845 = vmatprep.subr.bf16.mxu0 0
    %846 = vmatpush1.bf16.msra.mxu0 %v712
    %847 = vmatprep.subr.bf16.mxu0 0
    %848 = vmatpush1.bf16.msra.mxu0 %v715
    %849 = vmatprep.subr.bf16.mxu0 0
    %850 = vmatpush1.bf16.msra.mxu0 %v718
    %851 = vmatprep.subr.bf16.mxu0 0
    %852 = vmatpush1.bf16.msra.mxu0 %v721
    %853 = vmatprep.subr.bf16.mxu0 0
    %854 = vmatpush1.bf16.msra.mxu0 %v724
    %855 = vmatprep.subr.bf16.mxu0 0
    %856 = vmatpush1.bf16.msra.mxu0 %v727
    %857 = vmatprep.subr.bf16.mxu0 0
    %858 = vmatpush1.bf16.msra.mxu0 %v730
    %859 = vmatprep.subr.bf16.mxu0 0
    %860 = vmatpush1.bf16.msra.mxu0 %v733
    %861 = vmatprep.subr.bf16.mxu0 0
    %862 = vmatpush1.bf16.msra.mxu0 %v736
    %863 = vmatprep.subr.bf16.mxu0 0
    %864 = vmatpush1.bf16.msra.mxu0 %v739
    %865 = vmatprep.subr.bf16.mxu0 0
    %866 = vmatpush1.bf16.msra.mxu0 %v742
    %867 = vmatprep.subr.bf16.mxu0 0
    %868 = vmatpush1.bf16.msra.mxu0 %v745
    %869 = vmatprep.subr.bf16.mxu0 0
    %870 = vmatpush1.bf16.msra.mxu0 %v748
    %871 = vmatprep.subr.bf16.mxu0 0
    %872 = vmatpush1.bf16.msra.mxu0 %v751
    %873 = vmatprep.mubr.bf16.mxu0 %v462
    %874 = vmatmul.mubr.bf16.gmra.mrb[0].mxu0 %v461
    %v875 = vpop.f32.mrb[0].mxu0
    %v876 = vadd.f32 %v540, %v875
    %v877 = vpop.f32.mrb[0].mxu0
    %v878 = vpop.f32.mrb[0].mxu0
    %v879 = vpop.f32.mrb[0].mxu0
    %880 = vdwg.mxu0
    %v881 = vtanh.pop %v876
    %v882 = vld [vmem:[%s8] sm:$0x1]
    %v884 = vlaneseq
    %v885 = vshrl.u32 %v884, 7
    %v886 = vsub.s32 0, %v885
    %v887 = vrot.slane %v882, %v886
    %v889 = vmul.f32 %v881, %v887
    %890 = vadd.xlane.f32.xlu0 %v889
    %v891 = vpop.xlane.xlu0 %890
    %s892 = sld [smem:[#allocation2]]
    %v893 = vstv %s892
    %v894 = vadd.f32 %v891, %v893
    %v895 = vxor.u32 %v894, 2147483648
    %v896 = vmul.f32 %v895, 1.442695
    %v897 = vpow.pop %v896
    %v898 = vadd.f32 %v897, 1.0
    %v899 = vrcp.pop %v898
    %v900 = vmul.f32 1.0, %v899
    %v901 = vmul.f32 %v835, %v900
    %v902 = vmul.f32 %v837, %v900
    %v903 = vadd.f32 %v459, %v901
    %v904 = vadd.f32 %v460, %v902
    %v905 = vpack.c.bf16 %v903, %v903
    %v906 = vpack.c.bf16 %v904, %v904
    %v907 = vld [vmem:[#allocation11] sm:$0xff]
    %v908 = vld [vmem:[#allocation11 + $0x8] sm:$0xff]
    %v909 = vld [vmem:[#allocation11 + $0x10] sm:$0xff]
    %v910 = vld [vmem:[#allocation11 + $0x18] sm:$0xff]
    %v911 = vld [vmem:[#allocation11 + $0x20] sm:$0xff]
    %v912 = vld [vmem:[#allocation11 + $0x28] sm:$0xff]
    %v913 = vld [vmem:[#allocation11 + $0x30] sm:$0xff]
    %v914 = vld [vmem:[#allocation11 + $0x38] sm:$0xff]
    %v915 = vld [vmem:[#allocation11 + $0x40] sm:$0xff]
    %v916 = vld [vmem:[#allocation11 + $0x48] sm:$0xff]
    %v917 = vld [vmem:[#allocation11 + $0x50] sm:$0xff]
    %v918 = vld [vmem:[#allocation11 + $0x58] sm:$0xff]
    %v919 = vld [vmem:[#allocation11 + $0x60] sm:$0xff]
    %v920 = vld [vmem:[#allocation11 + $0x68] sm:$0xff]
    %v921 = vld [vmem:[#allocation11 + $0x70] sm:$0xff]
    %v922 = vld [vmem:[#allocation11 + $0x78] sm:$0xff]
    %v923 = vld [vmem:[#allocation11 + $0x80] sm:$0xff]
    %v924 = vld [vmem:[#allocation11 + $0x88] sm:$0xff]
    %v925 = vld [vmem:[#allocation11 + $0x90] sm:$0xff]
    %v926 = vld [vmem:[#allocation11 + $0x98] sm:$0xff]
    %v927 = vld [vmem:[#allocation11 + $0xa0] sm:$0xff]
    %v928 = vld [vmem:[#allocation11 + $0xa8] sm:$0xff]
    %v929 = vld [vmem:[#allocation11 + $0xb0] sm:$0xff]
    %v930 = vld [vmem:[#allocation11 + $0xb8] sm:$0xff]
    %v931 = vld [vmem:[#allocation11 + $0xc0] sm:$0xff]
    %v932 = vld [vmem:[#allocation11 + $0xc8] sm:$0xff]
    %v933 = vld [vmem:[#allocation11 + $0xd0] sm:$0xff]
    %v934 = vld [vmem:[#allocation11 + $0xd8] sm:$0xff]
    %v935 = vld [vmem:[#allocation11 + $0xe0] sm:$0xff]
    %v936 = vld [vmem:[#allocation11 + $0xe8] sm:$0xff]
    %v937 = vld [vmem:[#allocation11 + $0xf0] sm:$0xff]
    %v938 = vld [vmem:[#allocation11 + $0xf8] sm:$0xff]
    %v939 = vld [vmem:[%s10] sm:$0x3]
    %v941 = vlaneseq
    %v942 = vshrl.u32 %v941, 7
    %v943 = vsub.s32 0, %v942
    %v944 = vrot.slane %v939, %v943
    %v945 = vlaneseq
    %v946 = vshrl.u32 %v945, 7
    %v947 = vsub.s32 1, %v946
    %v948 = vrot.slane %v939, %v947
    %v983 = vunpack.c.l.b16 %v907
    %v984 = vunpack.c.h.b16 %v907
    %v985 = vunpack.c.l.b16 %v908
    %v986 = vunpack.c.h.b16 %v908
    %v987 = vunpack.c.l.b16 %v909
    %v988 = vunpack.c.h.b16 %v909
    %v989 = vunpack.c.l.b16 %v910
    %v990 = vunpack.c.h.b16 %v910
    %v991 = vunpack.c.l.b16 %v911
    %v992 = vunpack.c.h.b16 %v911
    %v993 = vunpack.c.l.b16 %v912
    %v994 = vunpack.c.h.b16 %v912
    %v995 = vunpack.c.l.b16 %v913
    %v996 = vunpack.c.h.b16 %v913
    %v997 = vunpack.c.l.b16 %v914
    %v998 = vunpack.c.h.b16 %v914
    %v999 = vunpack.c.l.b16 %v915
    %v1000 = vunpack.c.h.b16 %v915
    %v1001 = vunpack.c.l.b16 %v916
    %v1002 = vunpack.c.h.b16 %v916
    %v1003 = vunpack.c.l.b16 %v917
    %v1004 = vunpack.c.h.b16 %v917
    %v1005 = vunpack.c.l.b16 %v918
    %v1006 = vunpack.c.h.b16 %v918
    %v1007 = vunpack.c.l.b16 %v919
    %v1008 = vunpack.c.h.b16 %v919
    %v1009 = vunpack.c.l.b16 %v920
    %v1010 = vunpack.c.h.b16 %v920
    %v1011 = vunpack.c.l.b16 %v921
    %v1012 = vunpack.c.h.b16 %v921
    %v1013 = vunpack.c.l.b16 %v922
    %v1014 = vunpack.c.h.b16 %v922
    %v1015 = vunpack.c.l.b16 %v923
    %v1016 = vunpack.c.h.b16 %v923
    %v1017 = vunpack.c.l.b16 %v924
    %v1018 = vunpack.c.h.b16 %v924
    %v1019 = vunpack.c.l.b16 %v925
    %v1020 = vunpack.c.h.b16 %v925
    %v1021 = vunpack.c.l.b16 %v926
    %v1022 = vunpack.c.h.b16 %v926
    %v1023 = vunpack.c.l.b16 %v927
    %v1024 = vunpack.c.h.b16 %v927
    %v1025 = vunpack.c.l.b16 %v928
    %v1026 = vunpack.c.h.b16 %v928
    %v1027 = vunpack.c.l.b16 %v929
    %v1028 = vunpack.c.h.b16 %v929
    %v1029 = vunpack.c.l.b16 %v930
    %v1030 = vunpack.c.h.b16 %v930
    %v1031 = vunpack.c.l.b16 %v931
    %v1032 = vunpack.c.h.b16 %v931
    %v1033 = vunpack.c.l.b16 %v932
    %v1034 = vunpack.c.h.b16 %v932
    %v1035 = vunpack.c.l.b16 %v933
    %v1036 = vunpack.c.h.b16 %v933
    %v1037 = vunpack.c.l.b16 %v934
    %v1038 = vunpack.c.h.b16 %v934
    %v1039 = vunpack.c.l.b16 %v935
    %v1040 = vunpack.c.h.b16 %v935
    %v1041 = vunpack.c.l.b16 %v936
    %v1042 = vunpack.c.h.b16 %v936
    %v1043 = vunpack.c.l.b16 %v937
    %v1044 = vunpack.c.h.b16 %v937
    %v1045 = vunpack.c.l.b16 %v938
    %v1046 = vunpack.c.h.b16 %v938
    %v1047 = vpack.c.b16 %v985, %v983
    %v1048 = vpack.c.b16 %v986, %v984
    %v1049 = vpack.c.b16 %v989, %v987
    %v1050 = vpack.c.b16 %v990, %v988
    %v1051 = vpack.c.b16 %v993, %v991
    %v1052 = vpack.c.b16 %v994, %v992
    %v1053 = vpack.c.b16 %v997, %v995
    %v1054 = vpack.c.b16 %v998, %v996
    %v1055 = vpack.c.b16 %v1001, %v999
    %v1056 = vpack.c.b16 %v1002, %v1000
    %v1057 = vpack.c.b16 %v1005, %v1003
    %v1058 = vpack.c.b16 %v1006, %v1004
    %v1059 = vpack.c.b16 %v1009, %v1007
    %v1060 = vpack.c.b16 %v1010, %v1008
    %v1061 = vpack.c.b16 %v1013, %v1011
    %v1062 = vpack.c.b16 %v1014, %v1012
    %v1063 = vpack.c.b16 %v1017, %v1015
    %v1064 = vpack.c.b16 %v1018, %v1016
    %v1065 = vpack.c.b16 %v1021, %v1019
    %v1066 = vpack.c.b16 %v1022, %v1020
    %v1067 = vpack.c.b16 %v1025, %v1023
    %v1068 = vpack.c.b16 %v1026, %v1024
    %v1069 = vpack.c.b16 %v1029, %v1027
    %v1070 = vpack.c.b16 %v1030, %v1028
    %v1071 = vpack.c.b16 %v1033, %v1031
    %v1072 = vpack.c.b16 %v1034, %v1032
    %v1073 = vpack.c.b16 %v1037, %v1035
    %v1074 = vpack.c.b16 %v1038, %v1036
    %v1075 = vpack.c.b16 %v1041, %v1039
    %v1076 = vpack.c.b16 %v1042, %v1040
    %v1077 = vpack.c.b16 %v1045, %v1043
    %v1078 = vpack.c.b16 %v1046, %v1044
    %1111 = vmatprep.subr.bf16.mxu0 %v1048
    %1112 = vmatpush1.bf16.msra.mxu0 %v1047
    %1113 = vmatprep.subr.bf16.mxu0 %v1050
    %1114 = vmatpush1.bf16.msra.mxu0 %v1049
    %1115 = vmatprep.subr.bf16.mxu0 %v1052
    %1116 = vmatpush1.bf16.msra.mxu0 %v1051
    %1117 = vmatprep.subr.bf16.mxu0 %v1054
    %1118 = vmatpush1.bf16.msra.mxu0 %v1053
    %1119 = vmatprep.subr.bf16.mxu0 %v1056
    %1120 = vmatpush1.bf16.msra.mxu0 %v1055
    %1121 = vmatprep.subr.bf16.mxu0 %v1058
    %1122 = vmatpush1.bf16.msra.mxu0 %v1057
    %1123 = vmatprep.subr.bf16.mxu0 %v1060
    %1124 = vmatpush1.bf16.msra.mxu0 %v1059
    %1125 = vmatprep.subr.bf16.mxu0 %v1062
    %1126 = vmatpush1.bf16.msra.mxu0 %v1061
    %1127 = vmatprep.subr.bf16.mxu0 %v1064
    %1128 = vmatpush1.bf16.msra.mxu0 %v1063
    %1129 = vmatprep.subr.bf16.mxu0 %v1066
    %1130 = vmatpush1.bf16.msra.mxu0 %v1065
    %1131 = vmatprep.subr.bf16.mxu0 %v1068
    %1132 = vmatpush1.bf16.msra.mxu0 %v1067
    %1133 = vmatprep.subr.bf16.mxu0 %v1070
    %1134 = vmatpush1.bf16.msra.mxu0 %v1069
    %1135 = vmatprep.subr.bf16.mxu0 %v1072
    %1136 = vmatpush1.bf16.msra.mxu0 %v1071
    %1137 = vmatprep.subr.bf16.mxu0 %v1074
    %1138 = vmatpush1.bf16.msra.mxu0 %v1073
    %1139 = vmatprep.subr.bf16.mxu0 %v1076
    %1140 = vmatpush1.bf16.msra.mxu0 %v1075
    %1141 = vmatprep.subr.bf16.mxu0 %v1078
    %1142 = vmatpush1.bf16.msra.mxu0 %v1077
    %1143 = vmatprep.mubr.bf16.mxu0 %v906
    %1144 = vmatmul.mubr.bf16.gmra.mrb[0].mxu0 %v905
    %v1145 = vpop.f32.mrb[0].mxu0
    %v1146 = vadd.f32 %v944, %v1145
    %v1147 = vpop.f32.mrb[0].mxu0
    %v1148 = vadd.f32 %v948, %v1147
    %v1149 = vpop.f32.mrb[0].mxu0
    %v1150 = vpop.f32.mrb[0].mxu0
    %1151 = vdwg.mxu0
    %v1152 = vmax.f32 %v1146, 0.0
    %v1153 = vmax.f32 %v1148, 0.0
    %v1154 = vpack.c.bf16 %v1152, %v1152
    %v1155 = vpack.c.bf16 %v1153, %v1153
    %v1156 = vld [vmem:[#allocation12] sm:$0xf]
    %v1157 = vld [vmem:[#allocation12 + $0x4] sm:$0xf]
    %v1158 = vld [vmem:[#allocation12 + $0x8] sm:$0xf]
    %v1159 = vld [vmem:[#allocation12 + $0xc] sm:$0xf]
    %v1160 = vld [vmem:[#allocation12 + $0x10] sm:$0xf]
    %v1161 = vld [vmem:[#allocation12 + $0x14] sm:$0xf]
    %v1162 = vld [vmem:[#allocation12 + $0x18] sm:$0xf]
    %v1163 = vld [vmem:[#allocation12 + $0x1c] sm:$0xf]
    %v1164 = vld [vmem:[#allocation12 + $0x20] sm:$0xf]
    %v1165 = vld [vmem:[#allocation12 + $0x24] sm:$0xf]
    %v1166 = vld [vmem:[#allocation12 + $0x28] sm:$0xf]
    %v1167 = vld [vmem:[#allocation12 + $0x2c] sm:$0xf]
    %v1168 = vld [vmem:[#allocation12 + $0x30] sm:$0xf]
    %v1169 = vld [vmem:[#allocation12 + $0x34] sm:$0xf]
    %v1170 = vld [vmem:[#allocation12 + $0x38] sm:$0xf]
    %v1171 = vld [vmem:[#allocation12 + $0x3c] sm:$0xf]
    %v1172 = vld [vmem:[#allocation12 + $0x40] sm:$0xf]
    %v1173 = vld [vmem:[#allocation12 + $0x44] sm:$0xf]
    %v1174 = vld [vmem:[#allocation12 + $0x48] sm:$0xf]
    %v1175 = vld [vmem:[#allocation12 + $0x4c] sm:$0xf]
    %v1176 = vld [vmem:[#allocation12 + $0x50] sm:$0xf]
    %v1177 = vld [vmem:[#allocation12 + $0x54] sm:$0xf]
    %v1178 = vld [vmem:[#allocation12 + $0x58] sm:$0xf]
    %v1179 = vld [vmem:[#allocation12 + $0x5c] sm:$0xf]
    %v1180 = vld [vmem:[#allocation12 + $0x60] sm:$0xf]
    %v1181 = vld [vmem:[#allocation12 + $0x64] sm:$0xf]
    %v1182 = vld [vmem:[#allocation12 + $0x68] sm:$0xf]
    %v1183 = vld [vmem:[#allocation12 + $0x6c] sm:$0xf]
    %v1184 = vld [vmem:[#allocation12 + $0x70] sm:$0xf]
    %v1185 = vld [vmem:[#allocation12 + $0x74] sm:$0xf]
    %v1186 = vld [vmem:[#allocation12 + $0x78] sm:$0xf]
    %v1187 = vld [vmem:[#allocation12 + $0x7c] sm:$0xf]
    %v1188 = vld [vmem:[%s12] sm:$0x1]
    %v1190 = vlaneseq
    %v1191 = vshrl.u32 %v1190, 7
    %v1192 = vsub.s32 0, %v1191
    %v1193 = vrot.slane %v1188, %v1192
    %v1227 = vunpack.c.l.b16 %v1156
    %v1228 = vunpack.c.l.b16 %v1157
    %v1229 = vunpack.c.l.b16 %v1158
    %v1230 = vunpack.c.l.b16 %v1159
    %v1231 = vunpack.c.l.b16 %v1160
    %v1232 = vunpack.c.l.b16 %v1161
    %v1233 = vunpack.c.l.b16 %v1162
    %v1234 = vunpack.c.l.b16 %v1163
    %v1235 = vunpack.c.l.b16 %v1164
    %v1236 = vunpack.c.l.b16 %v1165
    %v1237 = vunpack.c.l.b16 %v1166
    %v1238 = vunpack.c.l.b16 %v1167
    %v1239 = vunpack.c.l.b16 %v1168
    %v1240 = vunpack.c.l.b16 %v1169
    %v1241 = vunpack.c.l.b16 %v1170
    %v1242 = vunpack.c.l.b16 %v1171
    %v1243 = vunpack.c.l.b16 %v1172
    %v1244 = vunpack.c.l.b16 %v1173
    %v1245 = vunpack.c.l.b16 %v1174
    %v1246 = vunpack.c.l.b16 %v1175
    %v1247 = vunpack.c.l.b16 %v1176
    %v1248 = vunpack.c.l.b16 %v1177
    %v1249 = vunpack.c.l.b16 %v1178
    %v1250 = vunpack.c.l.b16 %v1179
    %v1251 = vunpack.c.l.b16 %v1180
    %v1252 = vunpack.c.l.b16 %v1181
    %v1253 = vunpack.c.l.b16 %v1182
    %v1254 = vunpack.c.l.b16 %v1183
    %v1255 = vunpack.c.l.b16 %v1184
    %v1256 = vunpack.c.l.b16 %v1185
    %v1257 = vunpack.c.l.b16 %v1186
    %v1258 = vunpack.c.l.b16 %v1187
    %v1259 = vpack.c.b16 %v1228, %v1227
    %v1260 = vpack.c.b16 %v1230, %v1229
    %v1261 = vpack.c.b16 %v1232, %v1231
    %v1262 = vpack.c.b16 %v1234, %v1233
    %v1263 = vpack.c.b16 %v1236, %v1235
    %v1264 = vpack.c.b16 %v1238, %v1237
    %v1265 = vpack.c.b16 %v1240, %v1239
    %v1266 = vpack.c.b16 %v1242, %v1241
    %v1267 = vpack.c.b16 %v1244, %v1243
    %v1268 = vpack.c.b16 %v1246, %v1245
    %v1269 = vpack.c.b16 %v1248, %v1247
    %v1270 = vpack.c.b16 %v1250, %v1249
    %v1271 = vpack.c.b16 %v1252, %v1251
    %v1272 = vpack.c.b16 %v1254, %v1253
    %v1273 = vpack.c.b16 %v1256, %v1255
    %v1274 = vpack.c.b16 %v1258, %v1257
    %1291 = vmatprep.subr.bf16.mxu0 0
    %1292 = vmatpush1.bf16.msra.mxu0 %v1259
    %1293 = vmatprep.subr.bf16.mxu0 0
    %1294 = vmatpush1.bf16.msra.mxu0 %v1260
    %1295 = vmatprep.subr.bf16.mxu0 0
    %1296 = vmatpush1.bf16.msra.mxu0 %v1261
    %1297 = vmatprep.subr.bf16.mxu0 0
    %1298 = vmatpush1.bf16.msra.mxu0 %v1262
    %1299 = vmatprep.subr.bf16.mxu0 0
    %1300 = vmatpush1.bf16.msra.mxu0 %v1263
    %1301 = vmatprep.subr.bf16.mxu0 0
    %1302 = vmatpush1.bf16.msra.mxu0 %v1264
    %1303 = vmatprep.subr.bf16.mxu0 0
    %1304 = vmatpush1.bf16.msra.mxu0 %v1265
    %1305 = vmatprep.subr.bf16.mxu0 0
    %1306 = vmatpush1.bf16.msra.mxu0 %v1266
    %1307 = vmatprep.subr.bf16.mxu0 0
    %1308 = vmatpush1.bf16.msra.mxu0 %v1267
    %1309 = vmatprep.subr.bf16.mxu0 0
    %1310 = vmatpush1.bf16.msra.mxu0 %v1268
    %1311 = vmatprep.subr.bf16.mxu0 0
    %1312 = vmatpush1.bf16.msra.mxu0 %v1269
    %1313 = vmatprep.subr.bf16.mxu0 0
    %1314 = vmatpush1.bf16.msra.mxu0 %v1270
    %1315 = vmatprep.subr.bf16.mxu0 0
    %1316 = vmatpush1.bf16.msra.mxu0 %v1271
    %1317 = vmatprep.subr.bf16.mxu0 0
    %1318 = vmatpush1.bf16.msra.mxu0 %v1272
    %1319 = vmatprep.subr.bf16.mxu0 0
    %1320 = vmatpush1.bf16.msra.mxu0 %v1273
    %1321 = vmatprep.subr.bf16.mxu0 0
    %1322 = vmatpush1.bf16.msra.mxu0 %v1274
    %1323 = vmatprep.mubr.bf16.mxu0 %v1155
    %1324 = vmatmul.mubr.bf16.gmra.mrb[0].mxu0 %v1154
    %v1325 = vpop.f32.mrb[0].mxu0
    %v1326 = vadd.f32 %v1193, %v1325
    %v1327 = vpop.f32.mrb[0].mxu0
    %v1328 = vpop.f32.mrb[0].mxu0
    %v1329 = vpop.f32.mrb[0].mxu0
    %1330 = vdwg.mxu0
    %1331 = vadd.xlane.f32.xlu0 %v1326
    %v1332 = vpop.xlane.xlu0 %1331
    %v1333 = vsub.f32 %v1332, %v1326
    %v1334 = vmul.f32 %v1333, 0.125
    %v1335 = vsub.f32 %v1326, %v1334
    %1337 = vset.pattern.permute.xlu0 127
    %1338 = vperm.xlu0 %1337, %v1335
    %v1339 = vpop.permute.xlu0 %1338
    %v1341 = vadd.f32 %v1326, %v1339
    %v1342 = vpack.c.bf16 %v1341, %v1341
    %1343 = vst [vmem:[#allocation14] sm:$0xf] %v1342
    // Predicated region
    $region78: #{tpu_custom_call.1} parent=1 // pred_check
      _
    $region79: #{tpu_custom_call.1} parent=1 // pred_check_branch
      %1345 = sbr.rel (0) target = $region81
    $region80: #{tpu_custom_call.1} parent=1 // pred_region
      %s1347 = ssub.s32 64, 64
      %1348 = vsyncadd [#allocation5], %s1347
      %s1350 = sshll.u32 [#allocation14], 4
      %s1351 = int_to_ptr.vmem [resolvable:$true] %s1350
      %1353 = dma.vmem_to_hbm [thread:$0]  %s1351, 64, %s13, [#allocation5]
    $region81: #{tpu_custom_call.1} parent=1 // pred_fallthru
      _
    // Predicated region
    $region82: #{tpu_custom_call.1} parent=1 // pred_check
      _
    $region83: #{tpu_custom_call.1} parent=1 // pred_check_branch
      %1355 = sbr.rel (0) target = $region85
    $region84: #{tpu_custom_call.1} parent=1 // pred_region
      %1356 = dma.done [#allocation5], 64
    $region85: #{tpu_custom_call.1} parent=1 // pred_fallthru
      _
    %1357 = vsyncpa [#allocation4], 1
    %1358 = vsyncpa [#allocation7], 1
    %1359 = vsyncpa [#allocation10], 1
    %1360 = vsyncpa [#allocation13], 1
    %1361 = vsyncpa [#allocation5], 1

</llo_original>
